<compile_context>
chip_gen: v7x
topology: tpu7x:2x2x1
jax: 0.10.0
libtpu: 0.0.40
codegen_flags: <defaults>
</compile_context>

<pallas_src>
import numpy as np
import jax
import jax.numpy as jnp
from jax import lax
from jax.experimental import pallas as pl
from jax.experimental.pallas import tpu as pltpu


# ----------------------------- host-side helpers -----------------------------

def bilinear_matrix(n_in, n_out):
    """1-D bilinear resize matrix (n_out, n_in), PyTorch align_corners=True."""
    i = np.arange(n_out)
    src = i * (n_in - 1) / max(n_out - 1, 1)
    lo = np.floor(src).astype(np.int64)
    hi = np.minimum(lo + 1, n_in - 1)
    frac = (src - lo).astype(np.float32)
    M = np.zeros((n_out, n_in), np.float32)
    M[i, lo] += (1.0 - frac)
    M[i, hi] += frac
    return M


def _pad_center(w, K):
    k = w.shape[-1]
    d = (K - k) // 2
    return jnp.pad(w, ((0, 0), (0, 0), (d, d), (d, d)))


def build_effective_params(params, alpha, cin, cout):
    """Fold the 4 alpha-scaled transposed-conv branches into one 7x7 transposed conv
    (w_eff, b_eff) and the 2 skip branches into one pointwise conv (w_pw, b_pw)."""
    K = 7
    w_sum = jnp.zeros((cin, cout, K, K), jnp.float32)
    b_eff = jnp.zeros((cout,), jnp.float32)
    # x[0]=7x7, x[1]=tconv5x5 attr (3x3 op), x[2]=tconv3x3 attr (5x5 op)
    for a_idx, wkey, bkey in ((0, 'w7', 'b7'), (1, 'w3', 'b3'), (2, 'w5', 'b5')):
        w_sum = w_sum + alpha[a_idx] * _pad_center(params[wkey], K)
        b_eff = b_eff + alpha[a_idx] * params[bkey]
    # x[3] = depthwise transposed 3x3 + pointwise 1x1  ->  dense 3x3 transposed conv
    wd = params['wd'][:, 0]                    # (Cin, 3, 3)
    wp = params['wp'][:, :, 0, 0]              # (Cout, Cin)
    w_comb = wd[:, None, :, :] * wp.T[:, :, None, None]      # (Cin, Cout, 3, 3)
    b_comb = params['bp'] + wp @ params['bd']
    w_sum = w_sum + alpha[3] * _pad_center(w_comb, K)
    b_eff = b_eff + alpha[3] * b_comb
    # transposed conv == stride-1 conv on the zero-dilated input with flipped kernel
    w_eff = jnp.flip(w_sum, (2, 3)).transpose(2, 3, 0, 1)     # (K, K, Cin, Cout)
    # x[4] (alpha*identity on upsampled x) + x[5] (skipconv, unscaled)
    assert cin == cout, "identity skip branch requires in_channels == out_channels"
    wsk = params['wsk'][:, :, 0, 0]
    w_pw = wsk.T + alpha[4] * jnp.eye(cin, cout, dtype=jnp.float32)   # (Cin, Cout)
    b_pw = params['bsk']
    return w_eff, b_eff, w_pw, b_pw


def build_phase_operands(w_eff, b_eff, w_pw, b_pw, H, W, cin, cout):
    """Pre-flatten weights into lane-dense slabs for the phase kernel.

    Phase p = 2*r + s produces output pixels (2a+r, 2b+s).  With x padded by (1,2):
      out_conv[a, b*Cout+co] = sum_{ty,tx,ci} w_eff[2ty+1-r, 2tx+1-s, ci, co]
                                              * xpad[a+ty, (b+tx)*Cin + ci]
    which becomes 4 matmuls (one per ty) against banded weights
      wband[p, ty][(w',ci), (b,co)] = w_eff[2ty+1-r, 2tx+1-s, ci, co],  w' = b + tx.
    """
    # 0/1 selection tensors (host numpy)
    Q = np.zeros((2, 4, 7), np.float32)            # Q[r, ty, ky], ky = 2*ty + 1 - r
    for r in range(2):
        for t in range(4):
            k = 2 * t + 1 - r
            if 0 <= k <= 6:
                Q[r, t, k] = 1.0
    P = np.zeros((4, W + 3, W), np.float32)        # P[tx, w', b], w' = b + tx
    for t in range(4):
        for b in range(W):
            P[t, b + t, b] = 1.0
    wband = jnp.einsum('rtk,sxl,xpb,klio->rstpibo',
                       jnp.asarray(Q), jnp.asarray(Q), jnp.asarray(P), w_eff)
    wband = wband.reshape(2, 2, 4, (W + 3) * cin, W * cout)
    wband = wband.reshape(4, 4, (W + 3) * cin, W * cout)      # phase-major (p = 2r+s)

    # Separable bilinear 2x upsample (align_corners=True), split by output parity.
    A = bilinear_matrix(H, 2 * H)                  # (2H, H)
    B = bilinear_matrix(W, 2 * W)                  # (2W, W)
    A_ph = A.reshape(H, 2, H).transpose(1, 0, 2)   # [r, a, h]
    B_ph = B.reshape(W, 2, W).transpose(1, 0, 2)   # [s, b, w]
    a_p = jnp.asarray(A_ph[[0, 0, 1, 1]])          # per phase: r = p // 2
    # W-axis resize fused with the folded 1x1 skip conv: kron(B_s^T, w_pw)
    k2 = jnp.einsum('sbw,io->swibo', jnp.asarray(B_ph), w_pw)
    k2 = k2.reshape(2, W * cin, W * cout)
    k2_p = k2[jnp.array([0, 1, 0, 1])]             # per phase: s = p % 2

    btile = jnp.tile(b_eff + b_pw, W)[None, :]     # (1, W*Cout), co minor
    return wband, k2_p, a_p, btile


# ------------------------------ Pallas kernel --------------------------------

def _phase_kernel(xpad_ref, x2_ref, wband_ref, k2_ref, a_ref, btile_ref, o_ref):
    H = x2_ref.shape[1]
    # Fused transposed-conv branches: 4 banded tap-row matmuls, contraction (W+3)*Cin.
    acc = jnp.dot(xpad_ref[0, 0:H, :], wband_ref[0, 0],
                  preferred_element_type=jnp.float32)
    for ty in range(1, 4):                          # static unroll, acc is 2 vregs
        acc = acc + jnp.dot(xpad_ref[0, ty:ty + H, :], wband_ref[0, ty],
                            preferred_element_type=jnp.float32)
    # Fused skip branches: separable bilinear 2x upsample + 1x1 conv.
    t1 = jnp.dot(x2_ref[0], k2_ref[0], preferred_element_type=jnp.float32)   # W-axis
    acc = acc + jnp.dot(a_ref[0], t1, preferred_element_type=jnp.float32)    # H-axis
    o_ref[0, 0] = (acc + btile_ref[...]).astype(o_ref.dtype)                 # lane-dense


def conv_trans_block(x_nchw, alpha, params):
    """Forward of ConvTransBlock.  x_nchw: (N, Cin, H, W) -> (N, Cout, 2H, 2W)."""
    N, Cin, H, W = x_nchw.shape
    Cout = params['b7'].shape[0]

    w_eff, b_eff, w_pw, b_pw = build_effective_params(params, alpha, Cin, Cout)
    wband, k2_p, a_p, btile = build_phase_operands(w_eff, b_eff, w_pw, b_pw,
                                                   H, W, Cin, Cout)

    # Layout plumbing (wrapper side): channels-last, width fused with channels on lanes.
    xt = jnp.transpose(x_nchw, (0, 2, 3, 1)).astype(jnp.float32)      # (N, H, W, Cin)
    xpad = jnp.pad(xt, ((0, 0), (1, 2), (1, 2), (0, 0)))
    xpad = xpad.reshape(N, H + 3, (W + 3) * Cin)
    x2 = xt.reshape(N, H, W * Cin)

    out_k = pl.pallas_call(
        _phase_kernel,
        out_shape=jax.ShapeDtypeStruct((N, 4, H, W * Cout), jnp.float32),
        grid_spec=pltpu.PrefetchScalarGridSpec(
            num_scalar_prefetch=0,
            grid=(N, 4),                                   # batch x output phase
            in_specs=[
                pl.BlockSpec((1, H + 3, (W + 3) * Cin), lambda n, p: (n, 0, 0)),
                pl.BlockSpec((1, H, W * Cin),           lambda n, p: (n, 0, 0)),
                pl.BlockSpec((1, 4, (W + 3) * Cin, W * Cout),
                             lambda n, p: (p, 0, 0, 0)),
                pl.BlockSpec((1, W * Cin, W * Cout),    lambda n, p: (p, 0, 0)),
                pl.BlockSpec((1, H, H),                 lambda n, p: (p, 0, 0)),
                pl.BlockSpec((1, W * Cout),             lambda n, p: (0, 0)),
            ],
            out_specs=pl.BlockSpec((1, 1, H, W * Cout), lambda n, p: (n, p, 0, 0)),
        ),
        compiler_params=pltpu.CompilerParams(
            dimension_semantics=("parallel", "parallel")),
    )(xpad, x2, wband, k2_p, a_p, btile)

    # Interleave the 4 phase outputs:  (n, r, s, a, b, co) -> (n, co, 2a+r, 2b+s)
    out = out_k.reshape(N, 2, 2, H, W, Cout)
    out = out.transpose(0, 5, 3, 1, 4, 2)
    return out.reshape(N, Cout, 2 * H, 2 * W)


# --------------------------- pure-JAX reference ------------------------------

def reference_forward(x, alpha, params):
    """NCHW pure-JAX replica of ConvTransBlock.forward (for verification)."""
    Cin = x.shape[1]
    H, W = x.shape[2], x.shape[3]
    dn = ('NCHW', 'OIHW', 'NCHW')

    def tconv(inp, w, b, k, p):
        rhs = jnp.flip(w, (2, 3)).transpose(1, 0, 2, 3)
        y = lax.conv_general_dilated(
            inp, rhs, window_strides=(1, 1),
            padding=[(k - 1 - p, k - p), (k - 1 - p, k - p)],
            lhs_dilation=(2, 2), dimension_numbers=dn)
        return y + b[None, :, None, None]

    y0 = tconv(x, params['w7'], params['b7'], 7, 3)
    y1 = tconv(x, params['w3'], params['b3'], 3, 1)
    y2 = tconv(x, params['w5'], params['b5'], 5, 2)
    rhs_d = jnp.flip(params['wd'], (2, 3))
    t = lax.conv_general_dilated(
        x, rhs_d, (1, 1), [(1, 2), (1, 2)], lhs_dilation=(2, 2),
        dimension_numbers=dn, feature_group_count=Cin)
    t = t + params['bd'][None, :, None, None]
    y3 = lax.conv_general_dilated(t, params['wp'], (1, 1), 'VALID',
                                  dimension_numbers=dn)
    y3 = y3 + params['bp'][None, :, None, None]
    A = jnp.asarray(bilinear_matrix(H, 2 * H))
    Bm = jnp.asarray(bilinear_matrix(W, 2 * W))
    xup = jnp.einsum('ph,qw,nchw->ncpq', A, Bm, x)
    y4 = xup
    y5 = lax.conv_general_dilated(xup, params['wsk'], (1, 1), 'VALID',
                                  dimension_numbers=dn)
    y5 = y5 + params['bsk'][None, :, None, None]
    return (alpha[0] * y0 + alpha[1] * y1 + alpha[2] * y2 + alpha[3] * y3
            + alpha[4] * y4 + y5)


# ----------------------------------- main -------------------------------------

if __name__ == "__main__":
    key = jax.random.PRNGKey(0)
    N, Cin, Cout, H, W = 2, 8, 8, 16, 16
    keys = jax.random.split(key, 14)

    def rnd(k, shape, scale=0.1):
        return scale * jax.random.normal(k, shape, jnp.float32)

    params = {
        'w7': rnd(keys[0], (Cin, Cout, 7, 7)),   'b7': rnd(keys[1], (Cout,)),
        'w3': rnd(keys[2], (Cin, Cout, 3, 3)),   'b3': rnd(keys[3], (Cout,)),
        'w5': rnd(keys[4], (Cin, Cout, 5, 5)),   'b5': rnd(keys[5], (Cout,)),
        'wd': rnd(keys[6], (Cin, 1, 3, 3)),      'bd': rnd(keys[7], (Cin,)),
        'wp': rnd(keys[8], (Cout, Cin, 1, 1)),   'bp': rnd(keys[9], (Cout,)),
        'wsk': rnd(keys[10], (Cout, Cin, 1, 1)), 'bsk': rnd(keys[11], (Cout,)),
    }
    alpha = jax.random.uniform(keys[12], (6,), jnp.float32)
    x = jax.random.normal(keys[13], (N, Cin, H, W), jnp.float32)

    out = conv_trans_block(x, alpha, params)
    out = jax.block_until_ready(out)
    assert out.shape == (N, Cout, 2 * H, 2 * W), out.shape

    ref = reference_forward(x, alpha, params)
    err = float(jnp.max(jnp.abs(out - ref)))
    if not err < 1e-3:
        raise SystemExit(f"max abs error too large: {err}")
    print("KERNEL_OK")
</pallas_src>

<mosaic_0001>
module attributes {stable_mosaic.version = 11 : i64} {
  func.func @_phase_kernel(%arg0: i32, %arg1: i32, %arg2: memref<1x19x152xf32, #tpu.memory_space<vmem>>, %arg3: memref<1x16x128xf32, #tpu.memory_space<vmem>>, %arg4: memref<1x4x152x128xf32, #tpu.memory_space<vmem>>, %arg5: memref<1x128x128xf32, #tpu.memory_space<vmem>>, %arg6: memref<1x16x16xf32, #tpu.memory_space<vmem>>, %arg7: memref<1x128xf32, #tpu.memory_space<vmem>>, %arg8: memref<1x1x16x128xf32, #tpu.memory_space<vmem>>) attributes {dimension_semantics = [#tpu.dimension_semantics<parallel>, #tpu.dimension_semantics<parallel>], iteration_bounds = array<i64: 2, 4>, scalar_prefetch = 0 : i64, scratch_operands = 0 : i64, tpu.core_type = #tpu.core_type<tc>, window_params = [{transform_indices = @transform_0, window_bounds = array<i64: 1, 19, 152>}, {transform_indices = @transform_1, window_bounds = array<i64: 1, 16, 128>}, {transform_indices = @transform_2, window_bounds = array<i64: 1, 4, 152, 128>}, {transform_indices = @transform_3, window_bounds = array<i64: 1, 128, 128>}, {transform_indices = @transform_4, window_bounds = array<i64: 1, 16, 16>}, {pipeline_mode = #tpu.pipeline_mode<synchronous>, transform_indices = @transform_5, window_bounds = array<i64: 1, 128>}, {transform_indices = @transform_6, window_bounds = array<i64: 1, 1, 16, 128>}]} {
    %c0 = arith.constant 0 : index
    %c0_0 = arith.constant 0 : index
    %c0_1 = arith.constant 0 : index
    %0 = vector.load %arg2[%c0, %c0_0, %c0_1] : memref<1x19x152xf32, #tpu.memory_space<vmem>>, vector<1x16x152xf32>
    %1 = vector.shape_cast %0 : vector<1x16x152xf32> to vector<16x152xf32>
    %c0_2 = arith.constant 0 : index
    %c0_3 = arith.constant 0 : index
    %c0_4 = arith.constant 0 : index
    %c0_5 = arith.constant 0 : index
    %2 = vector.load %arg4[%c0_2, %c0_3, %c0_4, %c0_5] : memref<1x4x152x128xf32, #tpu.memory_space<vmem>>, vector<1x1x152x128xf32>
    %3 = vector.shape_cast %2 : vector<1x1x152x128xf32> to vector<152x128xf32>
    %cst = arith.constant dense<0.000000e+00> : vector<16x128xf32>
    %4 = tpu.matmul %1, %3, %cst {dimension_numbers = #tpu.dot_dimension_numbers<[1], [0], [0], [1], [0, 0, 1, 1], [], []>} : vector<16x152xf32>, vector<152x128xf32>, vector<16x128xf32> -> vector<16x128xf32>
    %c0_6 = arith.constant 0 : index
    %c1 = arith.constant 1 : index
    %c0_7 = arith.constant 0 : index
    %5 = vector.load %arg2[%c0_6, %c1, %c0_7] : memref<1x19x152xf32, #tpu.memory_space<vmem>>, vector<1x16x152xf32>
    %6 = vector.shape_cast %5 : vector<1x16x152xf32> to vector<16x152xf32>
    %c0_8 = arith.constant 0 : index
    %c1_9 = arith.constant 1 : index
    %c0_10 = arith.constant 0 : index
    %c0_11 = arith.constant 0 : index
    %7 = vector.load %arg4[%c0_8, %c1_9, %c0_10, %c0_11] : memref<1x4x152x128xf32, #tpu.memory_space<vmem>>, vector<1x1x152x128xf32>
    %8 = vector.shape_cast %7 : vector<1x1x152x128xf32> to vector<152x128xf32>
    %cst_12 = arith.constant dense<0.000000e+00> : vector<16x128xf32>
    %9 = tpu.matmul %6, %8, %cst_12 {dimension_numbers = #tpu.dot_dimension_numbers<[1], [0], [0], [1], [0, 0, 1, 1], [], []>} : vector<16x152xf32>, vector<152x128xf32>, vector<16x128xf32> -> vector<16x128xf32>
    %10 = arith.addf %4, %9 : vector<16x128xf32>
    %c0_13 = arith.constant 0 : index
    %c2 = arith.constant 2 : index
    %c0_14 = arith.constant 0 : index
    %11 = vector.load %arg2[%c0_13, %c2, %c0_14] : memref<1x19x152xf32, #tpu.memory_space<vmem>>, vector<1x16x152xf32>
    %12 = vector.shape_cast %11 : vector<1x16x152xf32> to vector<16x152xf32>
    %c0_15 = arith.constant 0 : index
    %c2_16 = arith.constant 2 : index
    %c0_17 = arith.constant 0 : index
    %c0_18 = arith.constant 0 : index
    %13 = vector.load %arg4[%c0_15, %c2_16, %c0_17, %c0_18] : memref<1x4x152x128xf32, #tpu.memory_space<vmem>>, vector<1x1x152x128xf32>
    %14 = vector.shape_cast %13 : vector<1x1x152x128xf32> to vector<152x128xf32>
    %cst_19 = arith.constant dense<0.000000e+00> : vector<16x128xf32>
    %15 = tpu.matmul %12, %14, %cst_19 {dimension_numbers = #tpu.dot_dimension_numbers<[1], [0], [0], [1], [0, 0, 1, 1], [], []>} : vector<16x152xf32>, vector<152x128xf32>, vector<16x128xf32> -> vector<16x128xf32>
    %16 = arith.addf %10, %15 : vector<16x128xf32>
    %c0_20 = arith.constant 0 : index
    %c3 = arith.constant 3 : index
    %c0_21 = arith.constant 0 : index
    %17 = vector.load %arg2[%c0_20, %c3, %c0_21] : memref<1x19x152xf32, #tpu.memory_space<vmem>>, vector<1x16x152xf32>
    %18 = vector.shape_cast %17 : vector<1x16x152xf32> to vector<16x152xf32>
    %c0_22 = arith.constant 0 : index
    %c3_23 = arith.constant 3 : index
    %c0_24 = arith.constant 0 : index
    %c0_25 = arith.constant 0 : index
    %19 = vector.load %arg4[%c0_22, %c3_23, %c0_24, %c0_25] : memref<1x4x152x128xf32, #tpu.memory_space<vmem>>, vector<1x1x152x128xf32>
    %20 = vector.shape_cast %19 : vector<1x1x152x128xf32> to vector<152x128xf32>
    %cst_26 = arith.constant dense<0.000000e+00> : vector<16x128xf32>
    %21 = tpu.matmul %18, %20, %cst_26 {dimension_numbers = #tpu.dot_dimension_numbers<[1], [0], [0], [1], [0, 0, 1, 1], [], []>} : vector<16x152xf32>, vector<152x128xf32>, vector<16x128xf32> -> vector<16x128xf32>
    %22 = arith.addf %16, %21 : vector<16x128xf32>
    %c0_27 = arith.constant 0 : index
    %c0_28 = arith.constant 0 : index
    %c0_29 = arith.constant 0 : index
    %23 = vector.load %arg3[%c0_27, %c0_28, %c0_29] : memref<1x16x128xf32, #tpu.memory_space<vmem>>, vector<1x16x128xf32>
    %24 = vector.shape_cast %23 : vector<1x16x128xf32> to vector<16x128xf32>
    %c0_30 = arith.constant 0 : index
    %c0_31 = arith.constant 0 : index
    %c0_32 = arith.constant 0 : index
    %25 = vector.load %arg5[%c0_30, %c0_31, %c0_32] : memref<1x128x128xf32, #tpu.memory_space<vmem>>, vector<1x128x128xf32>
    %26 = vector.shape_cast %25 : vector<1x128x128xf32> to vector<128x128xf32>
    %cst_33 = arith.constant dense<0.000000e+00> : vector<16x128xf32>
    %27 = tpu.matmul %24, %26, %cst_33 {dimension_numbers = #tpu.dot_dimension_numbers<[1], [0], [0], [1], [0, 0, 1, 1], [], []>} : vector<16x128xf32>, vector<128x128xf32>, vector<16x128xf32> -> vector<16x128xf32>
    %c0_34 = arith.constant 0 : index
    %c0_35 = arith.constant 0 : index
    %c0_36 = arith.constant 0 : index
    %28 = vector.load %arg6[%c0_34, %c0_35, %c0_36] : memref<1x16x16xf32, #tpu.memory_space<vmem>>, vector<1x16x16xf32>
    %29 = vector.shape_cast %28 : vector<1x16x16xf32> to vector<16x16xf32>
    %cst_37 = arith.constant dense<0.000000e+00> : vector<16x128xf32>
    %30 = tpu.matmul %29, %27, %cst_37 {dimension_numbers = #tpu.dot_dimension_numbers<[1], [0], [0], [1], [0, 0, 1, 1], [], []>} : vector<16x16xf32>, vector<16x128xf32>, vector<16x128xf32> -> vector<16x128xf32>
    %31 = arith.addf %22, %30 : vector<16x128xf32>
    %c0_38 = arith.constant 0 : index
    %c0_39 = arith.constant 0 : index
    %32 = vector.load %arg7[%c0_38, %c0_39] : memref<1x128xf32, #tpu.memory_space<vmem>>, vector<1x128xf32>
    %33 = vector.broadcast %32 : vector<1x128xf32> to vector<16x128xf32>
    %34 = arith.addf %31, %33 : vector<16x128xf32>
    %c0_40 = arith.constant 0 : index
    %c0_41 = arith.constant 0 : index
    %c0_42 = arith.constant 0 : index
    %c0_43 = arith.constant 0 : index
    %35 = vector.load %arg8[%c0_40, %c0_41, %c0_42, %c0_43] : memref<1x1x16x128xf32, #tpu.memory_space<vmem>>, vector<1x1x16x128xf32>
    %36 = vector.shape_cast %35 : vector<1x1x16x128xf32> to vector<16x128xf32>
    %37 = vector.shape_cast %34 : vector<16x128xf32> to vector<1x1x16x128xf32>
    tpu.vector_store %arg8[%c0_40, %c0_41, %c0_42, %c0_43], %37 {strides = array<i32>} : memref<1x1x16x128xf32, #tpu.memory_space<vmem>>, vector<1x1x16x128xf32>,
    return
  }
  func.func @transform_0(%arg0: i32, %arg1: i32) -> (i32, i32, i32) {
    %c0_i32 = arith.constant 0 : i32
    %c0_i32_0 = arith.constant 0 : i32
    %c0_i32_1 = arith.constant 0 : i32
    return %arg0, %c0_i32, %c0_i32_0 : i32, i32, i32
  }
  func.func @transform_1(%arg0: i32, %arg1: i32) -> (i32, i32, i32) {
    %c0_i32 = arith.constant 0 : i32
    %c0_i32_0 = arith.constant 0 : i32
    %c0_i32_1 = arith.constant 0 : i32
    return %arg0, %c0_i32, %c0_i32_0 : i32, i32, i32
  }
  func.func @transform_2(%arg0: i32, %arg1: i32) -> (i32, i32, i32, i32) {
    %c0_i32 = arith.constant 0 : i32
    %c0_i32_0 = arith.constant 0 : i32
    %c0_i32_1 = arith.constant 0 : i32
    %c0_i32_2 = arith.constant 0 : i32
    return %arg1, %c0_i32, %c0_i32_0, %c0_i32_1 : i32, i32, i32, i32
  }
  func.func @transform_3(%arg0: i32, %arg1: i32) -> (i32, i32, i32) {
    %c0_i32 = arith.constant 0 : i32
    %c0_i32_0 = arith.constant 0 : i32
    %c0_i32_1 = arith.constant 0 : i32
    return %arg1, %c0_i32, %c0_i32_0 : i32, i32, i32
  }
  func.func @transform_4(%arg0: i32, %arg1: i32) -> (i32, i32, i32) {
    %c0_i32 = arith.constant 0 : i32
    %c0_i32_0 = arith.constant 0 : i32
    %c0_i32_1 = arith.constant 0 : i32
    return %arg1, %c0_i32, %c0_i32_0 : i32, i32, i32
  }
  func.func @transform_5(%arg0: i32, %arg1: i32) -> (i32, i32) {
    %c0_i32 = arith.constant 0 : i32
    %c0_i32_0 = arith.constant 0 : i32
    %c0_i32_1 = arith.constant 0 : i32
    return %c0_i32, %c0_i32_0 : i32, i32
  }
  func.func @transform_6(%arg0: i32, %arg1: i32) -> (i32, i32, i32, i32) {
    %c0_i32 = arith.constant 0 : i32
    %c0_i32_0 = arith.constant 0 : i32
    %c0_i32_1 = arith.constant 0 : i32
    return %arg0, %arg1, %c0_i32, %c0_i32_0 : i32, i32, i32, i32
  }
}

</mosaic_0001>

<llo_original>
// kernel: tpu_custom_call.1
$region0: #{tpu_custom_call.1}
  #allocation0 [shape = 'u32[]', space=smem, size = 0x4, offset = 0x4, fixed_abs, tag = 'smem constant byte address 0x4 - core index']
  #allocation1 [shape = 'u32[144,128]{1,0:T(1,128)}', space=vmem, size = 0x12000, scoped, tag = 'internal scratch']
  %s0 = inlined_call_operand.vmem [shape: f32[2,19,152], index: 0, kind: input, shape index: {}]
  %s1 = inlined_call_operand.hbm [shape: f32[2,16,128], index: 1, kind: input, shape index: {}]
  %s2 = inlined_call_operand.hbm [shape: f32[4,4,152,128], index: 2, kind: input, shape index: {}]
  %s3 = inlined_call_operand.hbm [shape: f32[4,128,128], index: 3, kind: input, shape index: {}]
  %s4 = inlined_call_operand.hbm [shape: f32[4,16,16], index: 4, kind: input, shape index: {}]
  %s5 = inlined_call_operand.hbm [shape: f32[1,128], index: 5, kind: input, shape index: {}]
  %s6 = inlined_call_operand.hbm [shape: f32[2,4,16,128], index: 6, kind: output, shape index: {}]
  %s7 = sld [smem:[#allocation0]]
  $region77: #{tpu_custom_call.1} parent=0
    _
  %s9 = ssub.s32 1, %s7
  %s10 = scalar_select 0, %s9, %s7
  $region1: #{tpu_custom_call.1} parent=0
    #allocation2 [shape = 'u8[16384]{0}', space=vmem, size = 0x4000, scoped, tag = 'input window, operand 1']
    #allocation3 [shape = 's32[2]{0}', space=sflag, size = 0x8, scoped, tag = 'scoped memory for tpu_custom_call.1']
    #allocation4 [shape = 's32[2]{0}', space=sflag, size = 0x8, scoped, tag = 'scoped memory for tpu_custom_call.1']
    #allocation5 [shape = 'u8[622592]{0}', space=vmem, size = 0x98000, scoped, tag = 'input window, operand 2']
    #allocation6 [shape = 's32[2]{0}', space=sflag, size = 0x8, scoped, tag = 'scoped memory for tpu_custom_call.1']
    #allocation7 [shape = 'u8[131072]{0}', space=vmem, size = 0x20000, scoped, tag = 'input window, operand 3']
    #allocation8 [shape = 'u8[16384]{0}', space=vmem, size = 0x4000, scoped, tag = 'input window, operand 4']
    #allocation9 [shape = 's32[2]{0}', space=sflag, size = 0x8, scoped, tag = 'scoped memory for tpu_custom_call.1']
    #allocation10 [shape = 'u8[512]{0}', space=vmem, size = 0x400, scoped, tag = 'input window, operand 5, single buffered']
    #allocation11 [shape = 'u8[16384]{0}', space=vmem, size = 0x4000, scoped, tag = 'output window, operand 0']
    %11 = vsyncpa [#allocation3], 0
    %s12 = scalar_lea.sflag [#allocation3], 1
    %13 = vsyncpa %s12, 0
    %14 = vsyncpa [#allocation6], 0
    %s15 = scalar_lea.sflag [#allocation6], 1
    %16 = vsyncpa %s15, 0
    %17 = vsyncpa [#allocation9], 0
    %s18 = scalar_lea.sflag [#allocation9], 1
    %19 = vsyncpa %s18, 0
    %20 = vsyncpa [#allocation4], 0
    %s21 = scalar_lea.sflag [#allocation4], 1
    %22 = vsyncpa %s21, 0
    loop: start=0, step=1, limit=10
    $region2: #{tpu_custom_call.1} parent=1 // loop_pre_header
      _
    $region3: #{tpu_custom_call.1} parent=1 // loop_header
      %s24 = sphi 0, %s28
      %p25 = scmp.ge.s32.totalorder %s24, 10
      %s31 = sphi 0, %s43
      %s32 = sphi 0, %s39
      %s33 = sphi 0, %s31
      %s34 = sphi 0, %s32
      %s35 = sphi 0, %s33
      %s36 = sphi 0, %s34
      %s46 = sphi 0, %s48
      %s49 = sphi 0, %s46
      %s50 = sphi 0, %s49
      %s66 = sphi 0, %s50
      %s72 = sphi 0, %s74
      %s75 = sphi 0, %s72
      %s76 = sphi 0, %s75
      %s92 = sphi 0, %s76
      %s98 = sphi 0, %s100
      %s101 = sphi 0, %s98
      %s102 = sphi 0, %s101
      %s118 = sphi 0, %s102
      %s124 = sphi 0, %s126
      %s127 = sphi 0, %s124
      %s128 = sphi 0, %s127
      %s144 = sphi 0, %s128
      %s150 = sphi 0, %s152
      %s153 = sphi 0, %s150
      %s154 = sphi 0, %s153
      %s170 = sphi 0, %s154
      %s174 = sphi 0, %s174
      %s176 = sphi 0, %s174
      %s177 = sphi 0, %s176
      %s191 = sphi 0, %s177
      %s199 = sphi 0, %s201
      %s202 = sphi 0, %s199
      %s203 = sphi 0, %s202
      %s219 = sphi 0, %s203
    $region4: #{tpu_custom_call.1} parent=1 // loop_header_branch
      %27 = sbr.rel (%p25) target = $region8
    $region5: #{tpu_custom_call.1} parent=1 // loop_body
      %s29 = ssub.s32 %s24, 1
      %s30 = ssub.s32 %s24, 2
      %s37 = sadd.s32 1, %s32
      %p38 = scmp.ge.s32.totalorder %s37, 4
      %s39 = scalar_select %p38, 0, %s37
      %s40 = sadd.s32 1, %s31
      %s41 = scalar_select %p38, %s40, %s31
      %p42 = scmp.ge.s32.totalorder %s41, 2
      %s43 = scalar_select %p42, 0, %s41
      %s44 = ssub.s32 %s31, %s43
      %p45 = scmp.eq.s32.totalorder %s44, 0
      %s47 = sadd.s32 %s46, 1
      %s48 = scalar_select %p45, %s46, %s47
      %p51 = pneg %p45
      %p52 = scmp.eq.s32.totalorder %s24, 7
      %p53 = por %p51, %p52
      %p54 = scmp.ne.s32.totalorder %s46, %s49
      %p55 = scmp.eq.s32.totalorder %s24, 0
      %p56 = por %p54, %p55
      %p57 = scmp.ne.s32.totalorder %s46, %s49
      %p58 = scmp.eq.s32.totalorder %s29, 7
      %p59 = por %p57, %p58
      %p60 = scmp.ne.s32.totalorder %s49, %s50
      %p61 = scmp.eq.s32.totalorder %s29, 0
      %p62 = por %p60, %p61
      %p63 = scmp.ne.s32.totalorder %s49, %s50
      %p64 = scmp.eq.s32.totalorder %s30, 7
      %p65 = por %p63, %p64
      %p67 = scmp.ne.s32.totalorder %s50, %s66
      %p68 = scmp.eq.s32.totalorder %s30, 0
      %p69 = por %p67, %p68
      %s70 = ssub.s32 %s31, %s43
      %p71 = scmp.eq.s32.totalorder %s70, 0
      %s73 = sadd.s32 %s72, 1
      %s74 = scalar_select %p71, %s72, %s73
      %p77 = pneg %p71
      %p78 = scmp.eq.s32.totalorder %s24, 7
      %p79 = por %p77, %p78
      %p80 = scmp.ne.s32.totalorder %s72, %s75
      %p81 = scmp.eq.s32.totalorder %s24, 0
      %p82 = por %p80, %p81
      %p83 = scmp.ne.s32.totalorder %s72, %s75
      %p84 = scmp.eq.s32.totalorder %s29, 7
      %p85 = por %p83, %p84
      %p86 = scmp.ne.s32.totalorder %s75, %s76
      %p87 = scmp.eq.s32.totalorder %s29, 0
      %p88 = por %p86, %p87
      %p89 = scmp.ne.s32.totalorder %s75, %s76
      %p90 = scmp.eq.s32.totalorder %s30, 7
      %p91 = por %p89, %p90
      %p93 = scmp.ne.s32.totalorder %s76, %s92
      %p94 = scmp.eq.s32.totalorder %s30, 0
      %p95 = por %p93, %p94
      %s96 = ssub.s32 %s32, %s39
      %p97 = scmp.eq.s32.totalorder %s96, 0
      %s99 = sadd.s32 %s98, 1
      %s100 = scalar_select %p97, %s98, %s99
      %p103 = pneg %p97
      %p104 = scmp.eq.s32.totalorder %s24, 7
      %p105 = por %p103, %p104
      %p106 = scmp.ne.s32.totalorder %s98, %s101
      %p107 = scmp.eq.s32.totalorder %s24, 0
      %p108 = por %p106, %p107
      %p109 = scmp.ne.s32.totalorder %s98, %s101
      %p110 = scmp.eq.s32.totalorder %s29, 7
      %p111 = por %p109, %p110
      %p112 = scmp.ne.s32.totalorder %s101, %s102
      %p113 = scmp.eq.s32.totalorder %s29, 0
      %p114 = por %p112, %p113
      %p115 = scmp.ne.s32.totalorder %s101, %s102
      %p116 = scmp.eq.s32.totalorder %s30, 7
      %p117 = por %p115, %p116
      %p119 = scmp.ne.s32.totalorder %s102, %s118
      %p120 = scmp.eq.s32.totalorder %s30, 0
      %p121 = por %p119, %p120
      %s122 = ssub.s32 %s32, %s39
      %p123 = scmp.eq.s32.totalorder %s122, 0
      %s125 = sadd.s32 %s124, 1
      %s126 = scalar_select %p123, %s124, %s125
      %p129 = pneg %p123
      %p130 = scmp.eq.s32.totalorder %s24, 7
      %p131 = por %p129, %p130
      %p132 = scmp.ne.s32.totalorder %s124, %s127
      %p133 = scmp.eq.s32.totalorder %s24, 0
      %p134 = por %p132, %p133
      %p135 = scmp.ne.s32.totalorder %s124, %s127
      %p136 = scmp.eq.s32.totalorder %s29, 7
      %p137 = por %p135, %p136
      %p138 = scmp.ne.s32.totalorder %s127, %s128
      %p139 = scmp.eq.s32.totalorder %s29, 0
      %p140 = por %p138, %p139
      %p141 = scmp.ne.s32.totalorder %s127, %s128
      %p142 = scmp.eq.s32.totalorder %s30, 7
      %p143 = por %p141, %p142
      %p145 = scmp.ne.s32.totalorder %s128, %s144
      %p146 = scmp.eq.s32.totalorder %s30, 0
      %p147 = por %p145, %p146
      %s148 = ssub.s32 %s32, %s39
      %p149 = scmp.eq.s32.totalorder %s148, 0
      %s151 = sadd.s32 %s150, 1
      %s152 = scalar_select %p149, %s150, %s151
      %p155 = pneg %p149
      %p156 = scmp.eq.s32.totalorder %s24, 7
      %p157 = por %p155, %p156
      %p158 = scmp.ne.s32.totalorder %s150, %s153
      %p159 = scmp.eq.s32.totalorder %s24, 0
      %p160 = por %p158, %p159
      %p161 = scmp.ne.s32.totalorder %s150, %s153
      %p162 = scmp.eq.s32.totalorder %s29, 7
      %p163 = por %p161, %p162
      %p164 = scmp.ne.s32.totalorder %s153, %s154
      %p165 = scmp.eq.s32.totalorder %s29, 0
      %p166 = por %p164, %p165
      %p167 = scmp.ne.s32.totalorder %s153, %s154
      %p168 = scmp.eq.s32.totalorder %s30, 7
      %p169 = por %p167, %p168
      %p171 = scmp.ne.s32.totalorder %s154, %s170
      %p172 = scmp.eq.s32.totalorder %s30, 0
      %p173 = por %p171, %p172
      %s175 = sadd.s32 %s174, 1
      %p178 = scmp.eq.s32.totalorder %s24, 7
      %p179 = scmp.ne.s32.totalorder %s174, %s176
      %p180 = scmp.eq.s32.totalorder %s24, 0
      %p181 = por %p179, %p180
      %p182 = scmp.ne.s32.totalorder %s174, %s176
      %p183 = scmp.eq.s32.totalorder %s29, 7
      %p184 = por %p182, %p183
      %p185 = scmp.ne.s32.totalorder %s176, %s177
      %p186 = scmp.eq.s32.totalorder %s29, 0
      %p187 = por %p185, %p186
      %p188 = scmp.ne.s32.totalorder %s176, %s177
      %p189 = scmp.eq.s32.totalorder %s30, 7
      %p190 = por %p188, %p189
      %p192 = scmp.ne.s32.totalorder %s177, %s191
      %p193 = scmp.eq.s32.totalorder %s30, 0
      %p194 = por %p192, %p193
      %s195 = ssub.s32 %s31, %s43
      %s196 = ssub.s32 %s32, %s39
      %s197 = sor.u32 %s195, %s196
      %p198 = scmp.eq.s32.totalorder %s197, 0
      %s200 = sadd.s32 %s199, 1
      %s201 = scalar_select %p198, %s199, %s200
      %p204 = pneg %p198
      %p205 = scmp.eq.s32.totalorder %s24, 7
      %p206 = por %p204, %p205
      %p207 = scmp.ne.s32.totalorder %s199, %s202
      %p208 = scmp.eq.s32.totalorder %s24, 0
      %p209 = por %p207, %p208
      %p210 = scmp.ne.s32.totalorder %s199, %s202
      %p211 = scmp.eq.s32.totalorder %s29, 7
      %p212 = por %p210, %p211
      %p213 = scmp.ne.s32.totalorder %s202, %s203
      %p214 = scmp.eq.s32.totalorder %s29, 0
      %p215 = por %p213, %p214
      %p216 = scmp.ne.s32.totalorder %s202, %s203
      %p217 = scmp.eq.s32.totalorder %s30, 7
      %p218 = por %p216, %p217
      %p220 = scmp.ne.s32.totalorder %s203, %s219
      %p221 = scmp.eq.s32.totalorder %s30, 0
      %p222 = por %p220, %p221
      %p223 = scmp.le.s32.totalorder 1, %s24
      %p224 = scmp.lt.s32.totalorder %s24, 9
      %p225 = pnand %p223, %p224
      %p226 = pneg %p225
      // Predicated region
      $region9: #{tpu_custom_call.1} parent=5 // pred_check
        _
      $region10: #{tpu_custom_call.1} parent=5 // pred_check_branch
        %228 = sbr.rel (%p225) target = $region12
      $region11: #{tpu_custom_call.1} parent=5 // pred_region
        %s229 = ssub.s32 %s24, 1
        // Predicated region
        $region13: #{tpu_custom_call.1} parent=11 // pred_check
          %p230 = pneg %p187
        $region14: #{tpu_custom_call.1} parent=11 // pred_check_branch
          %232 = sbr.rel (%p230) target = $region16
        $region15: #{tpu_custom_call.1} parent=11 // pred_region
          %s234 = ssub.s32 16, 16
          %235 = vsyncadd [#allocation9], %s234
          %s237 = sshll.u32 [#allocation10], 4
          %s238 = int_to_ptr.vmem [resolvable:$true] %s237
          %240 = dma.hbm_to_vmem [thread:$0]  %s5, 16, %s238, [#allocation9]
        $region16: #{tpu_custom_call.1} parent=11 // pred_fallthru
          _
      $region12: #{tpu_custom_call.1} parent=5 // pred_fallthru
        _
      %p241 = scmp.lt.s32.totalorder %s24, 8
      // Predicated region
      $region17: #{tpu_custom_call.1} parent=5 // pred_check
        %p242 = pneg %p241
      $region18: #{tpu_custom_call.1} parent=5 // pred_check_branch
        %244 = sbr.rel (%p242) target = $region20
      $region19: #{tpu_custom_call.1} parent=5 // pred_region
        // Predicated region
        $region21: #{tpu_custom_call.1} parent=19 // pred_check
          %p245 = pneg %p56
        $region22: #{tpu_custom_call.1} parent=19 // pred_check_branch
          %247 = sbr.rel (%p245) target = $region24
        $region23: #{tpu_custom_call.1} parent=19 // pred_region
          %p248 = scmp.lt.s32.totalorder %s31, 1
          %s249 = scalar_select %p248, %s31, 1
          %s250 = smul.addr %s249, 6
          %s251 = smul.addr %s250, 8
          %s252 = scalar_lea.vmem %s0, %s251
        $region24: #{tpu_custom_call.1} parent=19 // pred_fallthru
          _
        // Predicated region
        $region25: #{tpu_custom_call.1} parent=19 // pred_check
          %p253 = pneg %p82
        $region26: #{tpu_custom_call.1} parent=19 // pred_check_branch
          %255 = sbr.rel (%p253) target = $region28
        $region27: #{tpu_custom_call.1} parent=19 // pred_region
          %s256 = sand.u32 %s72, 1
          %s257 = scalar_lea.sflag [#allocation3], %s256
          %s258 = sand.u32 %s72, 1
          %s259 = smul.addr %s258, 16
          %s260 = scalar_lea.vmem [#allocation2], %s259
          %s262 = ssub.s32 256, 256
          %263 = vsyncadd %s257, %s262
          %s264 = smul.addr %s31, 2
          %s265 = smul.addr %s264, 128
          %s266 = scalar_lea.hbm %s1, %s265
          %s267 = sshll.u32 %s260, 4
          %s268 = int_to_ptr.vmem [resolvable:$true] %s267
          %273 = dma.hbm_to_vmem [thread:$0]  %s266, 256, %s268, %s257, 128, 128, 8
        $region28: #{tpu_custom_call.1} parent=19 // pred_fallthru
          _
        // Predicated region
        $region29: #{tpu_custom_call.1} parent=19 // pred_check
          %p274 = pneg %p108
        $region30: #{tpu_custom_call.1} parent=19 // pred_check_branch
          %276 = sbr.rel (%p274) target = $region32
        $region31: #{tpu_custom_call.1} parent=19 // pred_region
          %s277 = sand.u32 %s24, 1
          %s278 = scalar_lea.sflag [#allocation6], %s277
          %s279 = sand.u32 %s98, 1
          %s280 = smul.addr %s279, 608
          %s281 = scalar_lea.vmem [#allocation5], %s280
          %s283 = ssub.s32 9728, 9728
          %284 = vsyncadd %s278, %s283
          %s285 = smul.addr %s32, 76
          %s286 = smul.addr %s285, 128
          %s287 = scalar_lea.hbm %s2, %s286
          %s288 = sshll.u32 %s281, 4
          %s289 = int_to_ptr.vmem [resolvable:$true] %s288
          %294 = dma.hbm_to_vmem [thread:$0]  %s287, 9728, %s289, %s278, 128, 128, 8
        $region32: #{tpu_custom_call.1} parent=19 // pred_fallthru
          _
        // Predicated region
        $region33: #{tpu_custom_call.1} parent=19 // pred_check
          %p295 = pneg %p134
        $region34: #{tpu_custom_call.1} parent=19 // pred_check_branch
          %297 = sbr.rel (%p295) target = $region36
        $region35: #{tpu_custom_call.1} parent=19 // pred_region
          %s298 = sand.u32 %s24, 1
          %s299 = scalar_lea.sflag [#allocation6], %s298
          %s300 = sand.u32 %s124, 1
          %s301 = smul.addr %s300, 128
          %s302 = scalar_lea.vmem [#allocation7], %s301
          %s304 = ssub.s32 2048, 2048
          %305 = vsyncadd %s299, %s304
          %s306 = smul.addr %s32, 16
          %s307 = smul.addr %s306, 128
          %s308 = scalar_lea.hbm %s3, %s307
          %s309 = sshll.u32 %s302, 4
          %s310 = int_to_ptr.vmem [resolvable:$true] %s309
          %315 = dma.hbm_to_vmem [thread:$0]  %s308, 2048, %s310, %s299, 128, 128, 8
        $region36: #{tpu_custom_call.1} parent=19 // pred_fallthru
          _
        // Predicated region
        $region37: #{tpu_custom_call.1} parent=19 // pred_check
          %p316 = pneg %p160
        $region38: #{tpu_custom_call.1} parent=19 // pred_check_branch
          %318 = sbr.rel (%p316) target = $region40
        $region39: #{tpu_custom_call.1} parent=19 // pred_region
          %s319 = sand.u32 %s24, 1
          %s320 = scalar_lea.sflag [#allocation9], %s319
          %s321 = sand.u32 %s150, 1
          %s322 = smul.addr %s321, 16
          %s323 = scalar_lea.vmem [#allocation8], %s322
          %s325 = ssub.s32 256, 256
          %326 = vsyncadd %s320, %s325
          %s327 = smul.addr %s32, 2
          %s328 = smul.addr %s327, 128
          %s329 = scalar_lea.hbm %s4, %s328
          %s330 = sshll.u32 %s323, 4
          %s331 = int_to_ptr.vmem [resolvable:$true] %s330
          %336 = dma.hbm_to_vmem [thread:$0]  %s329, 256, %s331, %s320, 128, 128, 8
        $region40: #{tpu_custom_call.1} parent=19 // pred_fallthru
          _
      $region20: #{tpu_custom_call.1} parent=5 // pred_fallthru
        _
      %p337 = scmp.le.s32.totalorder 1, %s24
      %p338 = scmp.lt.s32.totalorder %s24, 9
      %p339 = pnand %p337, %p338
      %p340 = pneg %p339
      // Predicated region
      $region41: #{tpu_custom_call.1} parent=5 // pred_check
        _
      $region42: #{tpu_custom_call.1} parent=5 // pred_check_branch
        %342 = sbr.rel (%p339) target = $region44
      $region43: #{tpu_custom_call.1} parent=5 // pred_region
        %s343 = ssub.s32 %s24, 1
        %s344 = sand.u32 %s75, 1
        %s345 = scalar_lea.sflag [#allocation3], %s344
        %s346 = sand.u32 %s75, 1
        %s347 = smul.addr %s346, 16
        %s348 = scalar_lea.vmem [#allocation2], %s347
        // Predicated region
        $region45: #{tpu_custom_call.1} parent=43 // pred_check
          %p349 = pneg %p88
        $region46: #{tpu_custom_call.1} parent=43 // pred_check_branch
          %351 = sbr.rel (%p349) target = $region48
        $region47: #{tpu_custom_call.1} parent=43 // pred_region
          %352 = dma.done %s345, 256
        $region48: #{tpu_custom_call.1} parent=43 // pred_fallthru
          _
        %s353 = sand.u32 %s29, 1
        %s354 = scalar_lea.sflag [#allocation6], %s353
        %s355 = sand.u32 %s101, 1
        %s356 = smul.addr %s355, 608
        %s357 = scalar_lea.vmem [#allocation5], %s356
        // Predicated region
        $region49: #{tpu_custom_call.1} parent=43 // pred_check
          %p358 = pneg %p114
        $region50: #{tpu_custom_call.1} parent=43 // pred_check_branch
          %360 = sbr.rel (%p358) target = $region52
        $region51: #{tpu_custom_call.1} parent=43 // pred_region
          %361 = dma.done %s354, 9728
        $region52: #{tpu_custom_call.1} parent=43 // pred_fallthru
          _
        %s362 = sand.u32 %s29, 1
        %s363 = scalar_lea.sflag [#allocation6], %s362
        %s364 = sand.u32 %s127, 1
        %s365 = smul.addr %s364, 128
        %s366 = scalar_lea.vmem [#allocation7], %s365
        // Predicated region
        $region53: #{tpu_custom_call.1} parent=43 // pred_check
          %p367 = pneg %p140
        $region54: #{tpu_custom_call.1} parent=43 // pred_check_branch
          %369 = sbr.rel (%p367) target = $region56
        $region55: #{tpu_custom_call.1} parent=43 // pred_region
          %370 = dma.done %s363, 2048
        $region56: #{tpu_custom_call.1} parent=43 // pred_fallthru
          _
        %s371 = sand.u32 %s29, 1
        %s372 = scalar_lea.sflag [#allocation9], %s371
        %s373 = sand.u32 %s153, 1
        %s374 = smul.addr %s373, 16
        %s375 = scalar_lea.vmem [#allocation8], %s374
        // Predicated region
        $region57: #{tpu_custom_call.1} parent=43 // pred_check
          %p376 = pneg %p166
        $region58: #{tpu_custom_call.1} parent=43 // pred_check_branch
          %378 = sbr.rel (%p376) target = $region60
        $region59: #{tpu_custom_call.1} parent=43 // pred_region
          %379 = dma.done %s372, 256
        $region60: #{tpu_custom_call.1} parent=43 // pred_fallthru
          _
        // Predicated region
        $region61: #{tpu_custom_call.1} parent=43 // pred_check
          %p380 = pneg %p187
        $region62: #{tpu_custom_call.1} parent=43 // pred_check_branch
          %382 = sbr.rel (%p380) target = $region64
        $region63: #{tpu_custom_call.1} parent=43 // pred_region
          %383 = dma.done [#allocation9], 16
        $region64: #{tpu_custom_call.1} parent=43 // pred_fallthru
          _
        %p384 = scmp.lt.s32.totalorder %s33, 1
        %s385 = scalar_select %p384, %s33, 1
        %s386 = smul.addr %s385, 6
        %s387 = smul.addr %s386, 8
        %s388 = scalar_lea.vmem %s0, %s387
        %p389 = pneg %p62
        %p390 = pneg %p59
        %s391 = sand.u32 %s75, 1
        %s392 = scalar_lea.sflag [#allocation3], %s391
        %s393 = sand.u32 %s75, 1
        %s394 = smul.addr %s393, 16
        %s395 = scalar_lea.vmem [#allocation2], %s394
        %p396 = pneg %p88
        %p397 = pneg %p85
        %s398 = sand.u32 %s29, 1
        %s399 = scalar_lea.sflag [#allocation6], %s398
        %s400 = sand.u32 %s101, 1
        %s401 = smul.addr %s400, 608
        %s402 = scalar_lea.vmem [#allocation5], %s401
        %p403 = pneg %p114
        %p404 = pneg %p111
        %s405 = sand.u32 %s29, 1
        %s406 = scalar_lea.sflag [#allocation6], %s405
        %s407 = sand.u32 %s127, 1
        %s408 = smul.addr %s407, 128
        %s409 = scalar_lea.vmem [#allocation7], %s408
        %p410 = pneg %p140
        %p411 = pneg %p137
        %s412 = sand.u32 %s29, 1
        %s413 = scalar_lea.sflag [#allocation9], %s412
        %s414 = sand.u32 %s153, 1
        %s415 = smul.addr %s414, 16
        %s416 = scalar_lea.vmem [#allocation8], %s415
        %p417 = pneg %p166
        %p418 = pneg %p163
        %p419 = pneg %p187
        %p420 = pneg %p184
        %p421 = pneg %p215
        %p422 = pneg %p212
        %s423 = sand.u32 %s202, 1
        %s424 = scalar_lea.sflag [#allocation4], %s423
        %s425 = sand.u32 %s202, 1
        %s426 = smul.addr %s425, 16
        %s427 = scalar_lea.vmem [#allocation11], %s426
        %p428 = scmp.lt.s32.totalorder %s33, 1
        %s429 = scalar_select %p428, %s33, 1
        %s430 = smul.addr %s429, 6
        %s431 = smul.addr %s430, 8
        %s432 = scalar_lea.vmem %s0, %s431
        %v433 = vld [vmem:[%s432] sm:$0xff]
        %v434 = vld [vmem:[%s432 + $0x8] sm:$0xff]
        %v435 = vld [vmem:[%s432 + $0x10] sm:$0xff]
        %v436 = vld [vmem:[%s432 + $0x18] sm:$0xff]
        %v437 = vld [vmem:[%s357] sm:$0xff]
        %v438 = vld [vmem:[%s357 + $0x8] sm:$0xff]
        %v439 = vld [vmem:[%s357 + $0x10] sm:$0xff]
        %v440 = vld [vmem:[%s357 + $0x18] sm:$0xff]
        %v441 = vld [vmem:[%s357 + $0x20] sm:$0xff]
        %v442 = vld [vmem:[%s357 + $0x28] sm:$0xff]
        %v443 = vld [vmem:[%s357 + $0x30] sm:$0xff]
        %v444 = vld [vmem:[%s357 + $0x38] sm:$0xff]
        %v445 = vld [vmem:[%s357 + $0x40] sm:$0xff]
        %v446 = vld [vmem:[%s357 + $0x48] sm:$0xff]
        %v447 = vld [vmem:[%s357 + $0x50] sm:$0xff]
        %v448 = vld [vmem:[%s357 + $0x58] sm:$0xff]
        %v449 = vld [vmem:[%s357 + $0x60] sm:$0xff]
        %v450 = vld [vmem:[%s357 + $0x68] sm:$0xff]
        %v451 = vld [vmem:[%s357 + $0x70] sm:$0xff]
        %v452 = vld [vmem:[%s357 + $0x78] sm:$0xff]
        %v453 = vld [vmem:[%s357 + $0x80] sm:$0xff]
        %v454 = vld [vmem:[%s357 + $0x88] sm:$0xff]
        %v455 = vld [vmem:[%s357 + $0x90] sm:$0xff]
        %v456 = vld [vmem:[%s432] sm:$0xfe]
        %v457 = vld [vmem:[%s432 + $0x8] sm:$0xfe]
        %v458 = vld [vmem:[%s432 + $0x20] sm:$0x1]
        %v459 = vld [vmem:[%s432 + $0x28] sm:$0x1]
        %s460 = scalar_lea.vmem %s357, 152 [#allocation5]
        %v461 = vld [vmem:[%s460] sm:$0xff]
        %v462 = vld [vmem:[%s460 + $0x8] sm:$0xff]
        %v463 = vld [vmem:[%s460 + $0x10] sm:$0xff]
        %v464 = vld [vmem:[%s460 + $0x18] sm:$0xff]
        %v465 = vld [vmem:[%s460 + $0x20] sm:$0xff]
        %v466 = vld [vmem:[%s460 + $0x28] sm:$0xff]
        %v467 = vld [vmem:[%s460 + $0x30] sm:$0xff]
        %v468 = vld [vmem:[%s460 + $0x38] sm:$0xff]
        %v469 = vld [vmem:[%s460 + $0x40] sm:$0xff]
        %v470 = vld [vmem:[%s460 + $0x48] sm:$0xff]
        %v471 = vld [vmem:[%s460 + $0x50] sm:$0xff]
        %v472 = vld [vmem:[%s460 + $0x58] sm:$0xff]
        %v473 = vld [vmem:[%s460 + $0x60] sm:$0xff]
        %v474 = vld [vmem:[%s460 + $0x68] sm:$0xff]
        %v475 = vld [vmem:[%s460 + $0x70] sm:$0xff]
        %v476 = vld [vmem:[%s460 + $0x78] sm:$0xff]
        %v477 = vld [vmem:[%s460 + $0x80] sm:$0xff]
        %v478 = vld [vmem:[%s460 + $0x88] sm:$0xff]
        %v479 = vld [vmem:[%s460 + $0x90] sm:$0xff]
        %vm486 = vcmask 1046528
        %v487 = vrot.slane %v456, 1
        %v488 = vrot.slane %v435, 1
        %v489 = vsel %vm486, %v487, %v488
        %v490 = vrot.slane %v457, 1
        %v491 = vrot.slane %v436, 1
        %v492 = vsel %vm486, %v490, %v491
        %v493 = vrot.slane %v458, 1
        %v494 = vsel %vm486, %v488, %v493
        %v495 = vrot.slane %v459, 1
        %v496 = vsel %vm486, %v491, %v495
        %vm499 = vcmask 195584
        %v500 = vsel %vm499, %v492, 0
        %v502 = vsel %vm499, %v496, 0
        %504 = vmatprep.subr.mxu0 0.0
        %505 = vmatpush1.msra.mxu0 %v461
        %506 = vmatprep.subr.mxu0 0.0
        %507 = vmatpush1.msra.mxu0 %v462
        %508 = vmatprep.subr.mxu0 0.0
        %509 = vmatpush1.msra.mxu0 %v463
        %510 = vmatprep.subr.mxu0 0.0
        %511 = vmatpush1.msra.mxu0 %v464
        %512 = vmatprep.subr.mxu0 0.0
        %513 = vmatpush1.msra.mxu0 %v465
        %514 = vmatprep.subr.mxu0 0.0
        %515 = vmatpush1.msra.mxu0 %v466
        %516 = vmatprep.subr.mxu0 0.0
        %517 = vmatpush1.msra.mxu0 %v467
        %518 = vmatprep.subr.mxu0 0.0
        %519 = vmatpush1.msra.mxu0 %v468
        %520 = vmatprep.subr.mxu0 0.0
        %521 = vmatpush1.msra.mxu0 %v469
        %522 = vmatprep.subr.mxu0 0.0
        %523 = vmatpush1.msra.mxu0 %v470
        %524 = vmatprep.subr.mxu0 0.0
        %525 = vmatpush1.msra.mxu0 %v471
        %526 = vmatprep.subr.mxu0 0.0
        %527 = vmatpush1.msra.mxu0 %v472
        %528 = vmatprep.subr.mxu0 0.0
        %529 = vmatpush1.msra.mxu0 %v473
        %530 = vmatprep.subr.mxu0 0.0
        %531 = vmatpush1.msra.mxu0 %v474
        %532 = vmatprep.subr.mxu0 0.0
        %533 = vmatpush1.msra.mxu0 %v475
        %534 = vmatprep.subr.mxu0 0.0
        %535 = vmatpush1.msra.mxu0 %v476
        %536 = vmatprep.subr.mxu0 0.0
        %537 = vmatpush1.msra.mxu0 %v477
        %538 = vmatprep.subr.mxu0 0.0
        %539 = vmatpush1.msra.mxu0 %v478
        %540 = vmatprep.subr.mxu0 0.0
        %541 = vmatpush1.msra.mxu0 %v479
        %542 = vmatprep.subr.mxu0 0.0
        %543 = vmatpush1.msra.mxu0 0.0
        %544 = vmatprep.subr.mxu0 0.0
        %545 = vmatpush1.msra.mxu0 0.0
        %546 = vmatprep.subr.mxu0 0.0
        %547 = vmatpush1.msra.mxu0 0.0
        %548 = vmatprep.subr.mxu0 0.0
        %549 = vmatpush1.msra.mxu0 0.0
        %550 = vmatprep.subr.mxu0 0.0
        %551 = vmatpush1.msra.mxu0 0.0
        %552 = vmatprep.subr.mxu0 0.0
        %553 = vmatpush1.msra.mxu0 0.0
        %554 = vmatprep.subr.mxu0 0.0
        %555 = vmatpush1.msra.mxu0 0.0
        %556 = vmatprep.subr.mxu0 0.0
        %557 = vmatpush1.msra.mxu0 0.0
        %558 = vmatprep.subr.mxu0 0.0
        %559 = vmatpush1.msra.mxu0 0.0
        %560 = vmatprep.subr.mxu0 0.0
        %561 = vmatpush1.msra.mxu0 0.0
        %562 = vmatprep.subr.mxu0 0.0
        %563 = vmatpush1.msra.mxu0 0.0
        %564 = vmatprep.subr.mxu0 0.0
        %565 = vmatpush1.msra.mxu0 0.0
        %566 = vmatprep.subr.mxu0 0.0
        %567 = vmatpush1.msra.mxu0 0.0
        %568 = vmatprep.mubr.f32.mxu0 %v500
        %569 = vmatmul.mubr.f32.gmra.mrb[0].mxu0 %v489
        %v570 = vpop.f32.mrb[0].mxu0
        %v571 = vadd.f32 0.0, %v570
        %v572 = vpop.f32.mrb[0].mxu0
        %573 = vmatprep.mubr.f32.mxu0 %v502
        %574 = vmatmul.mubr.f32.gmra.mrb[0].mxu0 %v494
        %v575 = vpop.f32.mrb[0].mxu0
        %v576 = vadd.f32 0.0, %v575
        %v577 = vpop.f32.mrb[0].mxu0
        %578 = vdwg.mxu0
        %v580 = vsel %vm499, %v434, 0
        %v582 = vsel %vm499, %v436, 0
        %584 = vmatprep.subr.mxu0 0.0
        %585 = vmatpush1.msra.mxu0 %v437
        %586 = vmatprep.subr.mxu0 0.0
        %587 = vmatpush1.msra.mxu0 %v438
        %588 = vmatprep.subr.mxu0 0.0
        %589 = vmatpush1.msra.mxu0 %v439
        %590 = vmatprep.subr.mxu0 0.0
        %591 = vmatpush1.msra.mxu0 %v440
        %592 = vmatprep.subr.mxu0 0.0
        %593 = vmatpush1.msra.mxu0 %v441
        %594 = vmatprep.subr.mxu0 0.0
        %595 = vmatpush1.msra.mxu0 %v442
        %596 = vmatprep.subr.mxu0 0.0
        %597 = vmatpush1.msra.mxu0 %v443
        %598 = vmatprep.subr.mxu0 0.0
        %599 = vmatpush1.msra.mxu0 %v444
        %600 = vmatprep.subr.mxu0 0.0
        %601 = vmatpush1.msra.mxu0 %v445
        %602 = vmatprep.subr.mxu0 0.0
        %603 = vmatpush1.msra.mxu0 %v446
        %604 = vmatprep.subr.mxu0 0.0
        %605 = vmatpush1.msra.mxu0 %v447
        %606 = vmatprep.subr.mxu0 0.0
        %607 = vmatpush1.msra.mxu0 %v448
        %608 = vmatprep.subr.mxu0 0.0
        %609 = vmatpush1.msra.mxu0 %v449
        %610 = vmatprep.subr.mxu0 0.0
        %611 = vmatpush1.msra.mxu0 %v450
        %612 = vmatprep.subr.mxu0 0.0
        %613 = vmatpush1.msra.mxu0 %v451
        %614 = vmatprep.subr.mxu0 0.0
        %615 = vmatpush1.msra.mxu0 %v452
        %616 = vmatprep.subr.mxu0 0.0
        %617 = vmatpush1.msra.mxu0 %v453
        %618 = vmatprep.subr.mxu0 0.0
        %619 = vmatpush1.msra.mxu0 %v454
        %620 = vmatprep.subr.mxu0 0.0
        %621 = vmatpush1.msra.mxu0 %v455
        %622 = vmatprep.subr.mxu0 0.0
        %623 = vmatpush1.msra.mxu0 0.0
        %624 = vmatprep.subr.mxu0 0.0
        %625 = vmatpush1.msra.mxu0 0.0
        %626 = vmatprep.subr.mxu0 0.0
        %627 = vmatpush1.msra.mxu0 0.0
        %628 = vmatprep.subr.mxu0 0.0
        %629 = vmatpush1.msra.mxu0 0.0
        %630 = vmatprep.subr.mxu0 0.0
        %631 = vmatpush1.msra.mxu0 0.0
        %632 = vmatprep.subr.mxu0 0.0
        %633 = vmatpush1.msra.mxu0 0.0
        %634 = vmatprep.subr.mxu0 0.0
        %635 = vmatpush1.msra.mxu0 0.0
        %636 = vmatprep.subr.mxu0 0.0
        %637 = vmatpush1.msra.mxu0 0.0
        %638 = vmatprep.subr.mxu0 0.0
        %639 = vmatpush1.msra.mxu0 0.0
        %640 = vmatprep.subr.mxu0 0.0
        %641 = vmatpush1.msra.mxu0 0.0
        %642 = vmatprep.subr.mxu0 0.0
        %643 = vmatpush1.msra.mxu0 0.0
        %644 = vmatprep.subr.mxu0 0.0
        %645 = vmatpush1.msra.mxu0 0.0
        %646 = vmatprep.subr.mxu0 0.0
        %647 = vmatpush1.msra.mxu0 0.0
        %648 = vmatprep.mubr.f32.mxu0 %v580
        %649 = vmatmul.mubr.f32.gmra.mrb[0].mxu0 %v433
        %v650 = vpop.f32.mrb[0].mxu0
        %v651 = vadd.f32 %v571, %v650
        %v652 = vpop.f32.mrb[0].mxu0
        %653 = vmatprep.mubr.f32.mxu0 %v582
        %654 = vmatmul.mubr.f32.gmra.mrb[0].mxu0 %v435
        %v655 = vpop.f32.mrb[0].mxu0
        %v656 = vadd.f32 %v576, %v655
        %v657 = vpop.f32.mrb[0].mxu0
        %658 = vdwg.mxu0
        %v659 = vld [vmem:[%s432] sm:$0xfc]
        %v660 = vld [vmem:[%s432 + $0x8] sm:$0xfc]
        %v661 = vld [vmem:[%s432 + $0x20] sm:$0x3]
        %v662 = vld [vmem:[%s432 + $0x28] sm:$0x3]
        %s663 = scalar_lea.vmem %s357, 304 [#allocation5]
        %v664 = vld [vmem:[%s663] sm:$0xff]
        %v665 = vld [vmem:[%s663 + $0x8] sm:$0xff]
        %v666 = vld [vmem:[%s663 + $0x10] sm:$0xff]
        %v667 = vld [vmem:[%s663 + $0x18] sm:$0xff]
        %v668 = vld [vmem:[%s663 + $0x20] sm:$0xff]
        %v669 = vld [vmem:[%s663 + $0x28] sm:$0xff]
        %v670 = vld [vmem:[%s663 + $0x30] sm:$0xff]
        %v671 = vld [vmem:[%s663 + $0x38] sm:$0xff]
        %v672 = vld [vmem:[%s663 + $0x40] sm:$0xff]
        %v673 = vld [vmem:[%s663 + $0x48] sm:$0xff]
        %v674 = vld [vmem:[%s663 + $0x50] sm:$0xff]
        %v675 = vld [vmem:[%s663 + $0x58] sm:$0xff]
        %v676 = vld [vmem:[%s663 + $0x60] sm:$0xff]
        %v677 = vld [vmem:[%s663 + $0x68] sm:$0xff]
        %v678 = vld [vmem:[%s663 + $0x70] sm:$0xff]
        %v679 = vld [vmem:[%s663 + $0x78] sm:$0xff]
        %v680 = vld [vmem:[%s663 + $0x80] sm:$0xff]
        %v681 = vld [vmem:[%s663 + $0x88] sm:$0xff]
        %v682 = vld [vmem:[%s663 + $0x90] sm:$0xff]
        %vm687 = vcmask 1045504
        %v688 = vrot.slane %v659, 2
        %v689 = vrot.slane %v435, 2
        %v690 = vsel %vm687, %v688, %v689
        %v691 = vrot.slane %v660, 2
        %v692 = vrot.slane %v436, 2
        %v693 = vsel %vm687, %v691, %v692
        %v694 = vrot.slane %v661, 2
        %v695 = vsel %vm687, %v689, %v694
        %v696 = vrot.slane %v662, 2
        %v697 = vsel %vm687, %v692, %v696
        %v700 = vsel %vm499, %v693, 0
        %v702 = vsel %vm499, %v697, 0
        %704 = vmatprep.subr.mxu0 0.0
        %705 = vmatpush1.msra.mxu0 %v664
        %706 = vmatprep.subr.mxu0 0.0
        %707 = vmatpush1.msra.mxu0 %v665
        %708 = vmatprep.subr.mxu0 0.0
        %709 = vmatpush1.msra.mxu0 %v666
        %710 = vmatprep.subr.mxu0 0.0
        %711 = vmatpush1.msra.mxu0 %v667
        %712 = vmatprep.subr.mxu0 0.0
        %713 = vmatpush1.msra.mxu0 %v668
        %714 = vmatprep.subr.mxu0 0.0
        %715 = vmatpush1.msra.mxu0 %v669
        %716 = vmatprep.subr.mxu0 0.0
        %717 = vmatpush1.msra.mxu0 %v670
        %718 = vmatprep.subr.mxu0 0.0
        %719 = vmatpush1.msra.mxu0 %v671
        %720 = vmatprep.subr.mxu0 0.0
        %721 = vmatpush1.msra.mxu0 %v672
        %722 = vmatprep.subr.mxu0 0.0
        %723 = vmatpush1.msra.mxu0 %v673
        %724 = vmatprep.subr.mxu0 0.0
        %725 = vmatpush1.msra.mxu0 %v674
        %726 = vmatprep.subr.mxu0 0.0
        %727 = vmatpush1.msra.mxu0 %v675
        %728 = vmatprep.subr.mxu0 0.0
        %729 = vmatpush1.msra.mxu0 %v676
        %730 = vmatprep.subr.mxu0 0.0
        %731 = vmatpush1.msra.mxu0 %v677
        %732 = vmatprep.subr.mxu0 0.0
        %733 = vmatpush1.msra.mxu0 %v678
        %734 = vmatprep.subr.mxu0 0.0
        %735 = vmatpush1.msra.mxu0 %v679
        %736 = vmatprep.subr.mxu0 0.0
        %737 = vmatpush1.msra.mxu0 %v680
        %738 = vmatprep.subr.mxu0 0.0
        %739 = vmatpush1.msra.mxu0 %v681
        %740 = vmatprep.subr.mxu0 0.0
        %741 = vmatpush1.msra.mxu0 %v682
        %742 = vmatprep.subr.mxu0 0.0
        %743 = vmatpush1.msra.mxu0 0.0
        %744 = vmatprep.subr.mxu0 0.0
        %745 = vmatpush1.msra.mxu0 0.0
        %746 = vmatprep.subr.mxu0 0.0
        %747 = vmatpush1.msra.mxu0 0.0
        %748 = vmatprep.subr.mxu0 0.0
        %749 = vmatpush1.msra.mxu0 0.0
        %750 = vmatprep.subr.mxu0 0.0
        %751 = vmatpush1.msra.mxu0 0.0
        %752 = vmatprep.subr.mxu0 0.0
        %753 = vmatpush1.msra.mxu0 0.0
        %754 = vmatprep.subr.mxu0 0.0
        %755 = vmatpush1.msra.mxu0 0.0
        %756 = vmatprep.subr.mxu0 0.0
        %757 = vmatpush1.msra.mxu0 0.0
        %758 = vmatprep.subr.mxu0 0.0
        %759 = vmatpush1.msra.mxu0 0.0
        %760 = vmatprep.subr.mxu0 0.0
        %761 = vmatpush1.msra.mxu0 0.0
        %762 = vmatprep.subr.mxu0 0.0
        %763 = vmatpush1.msra.mxu0 0.0
        %764 = vmatprep.subr.mxu0 0.0
        %765 = vmatpush1.msra.mxu0 0.0
        %766 = vmatprep.subr.mxu0 0.0
        %767 = vmatpush1.msra.mxu0 0.0
        %768 = vmatprep.mubr.f32.mxu0 %v700
        %769 = vmatmul.mubr.f32.gmra.mrb[0].mxu0 %v690
        %v770 = vpop.f32.mrb[0].mxu0
        %v771 = vadd.f32 0.0, %v770
        %v772 = vpop.f32.mrb[0].mxu0
        %773 = vmatprep.mubr.f32.mxu0 %v702
        %774 = vmatmul.mubr.f32.gmra.mrb[0].mxu0 %v695
        %v775 = vpop.f32.mrb[0].mxu0
        %v776 = vadd.f32 0.0, %v775
        %v777 = vpop.f32.mrb[0].mxu0
        %778 = vdwg.mxu0
        %v779 = vadd.f32 %v651, %v771
        %v780 = vadd.f32 %v656, %v776
        %v781 = vld [vmem:[%s432] sm:$0xf8]
        %v782 = vld [vmem:[%s432 + $0x8] sm:$0xf8]
        %v783 = vld [vmem:[%s432 + $0x20] sm:$0x7]
        %v784 = vld [vmem:[%s432 + $0x28] sm:$0x7]
        %s785 = scalar_lea.vmem %s357, 456 [#allocation5]
        %v786 = vld [vmem:[%s785] sm:$0xff]
        %v787 = vld [vmem:[%s785 + $0x8] sm:$0xff]
        %v788 = vld [vmem:[%s785 + $0x10] sm:$0xff]
        %v789 = vld [vmem:[%s785 + $0x18] sm:$0xff]
        %v790 = vld [vmem:[%s785 + $0x20] sm:$0xff]
        %v791 = vld [vmem:[%s785 + $0x28] sm:$0xff]
        %v792 = vld [vmem:[%s785 + $0x30] sm:$0xff]
        %v793 = vld [vmem:[%s785 + $0x38] sm:$0xff]
        %v794 = vld [vmem:[%s785 + $0x40] sm:$0xff]
        %v795 = vld [vmem:[%s785 + $0x48] sm:$0xff]
        %v796 = vld [vmem:[%s785 + $0x50] sm:$0xff]
        %v797 = vld [vmem:[%s785 + $0x58] sm:$0xff]
        %v798 = vld [vmem:[%s785 + $0x60] sm:$0xff]
        %v799 = vld [vmem:[%s785 + $0x68] sm:$0xff]
        %v800 = vld [vmem:[%s785 + $0x70] sm:$0xff]
        %v801 = vld [vmem:[%s785 + $0x78] sm:$0xff]
        %v802 = vld [vmem:[%s785 + $0x80] sm:$0xff]
        %v803 = vld [vmem:[%s785 + $0x88] sm:$0xff]
        %v804 = vld [vmem:[%s785 + $0x90] sm:$0xff]
        %vm809 = vcmask 1044480
        %v810 = vrot.slane %v781, 3
        %v811 = vrot.slane %v435, 3
        %v812 = vsel %vm809, %v810, %v811
        %v813 = vrot.slane %v782, 3
        %v814 = vrot.slane %v436, 3
        %v815 = vsel %vm809, %v813, %v814
        %v816 = vrot.slane %v783, 3
        %v817 = vsel %vm809, %v811, %v816
        %v818 = vrot.slane %v784, 3
        %v819 = vsel %vm809, %v814, %v818
        %v822 = vsel %vm499, %v815, 0
        %v824 = vsel %vm499, %v819, 0
        %826 = vmatprep.subr.mxu0 0.0
        %827 = vmatpush1.msra.mxu0 %v786
        %828 = vmatprep.subr.mxu0 0.0
        %829 = vmatpush1.msra.mxu0 %v787
        %830 = vmatprep.subr.mxu0 0.0
        %831 = vmatpush1.msra.mxu0 %v788
        %832 = vmatprep.subr.mxu0 0.0
        %833 = vmatpush1.msra.mxu0 %v789
        %834 = vmatprep.subr.mxu0 0.0
        %835 = vmatpush1.msra.mxu0 %v790
        %836 = vmatprep.subr.mxu0 0.0
        %837 = vmatpush1.msra.mxu0 %v791
        %838 = vmatprep.subr.mxu0 0.0
        %839 = vmatpush1.msra.mxu0 %v792
        %840 = vmatprep.subr.mxu0 0.0
        %841 = vmatpush1.msra.mxu0 %v793
        %842 = vmatprep.subr.mxu0 0.0
        %843 = vmatpush1.msra.mxu0 %v794
        %844 = vmatprep.subr.mxu0 0.0
        %845 = vmatpush1.msra.mxu0 %v795
        %846 = vmatprep.subr.mxu0 0.0
        %847 = vmatpush1.msra.mxu0 %v796
        %848 = vmatprep.subr.mxu0 0.0
        %849 = vmatpush1.msra.mxu0 %v797
        %850 = vmatprep.subr.mxu0 0.0
        %851 = vmatpush1.msra.mxu0 %v798
        %852 = vmatprep.subr.mxu0 0.0
        %853 = vmatpush1.msra.mxu0 %v799
        %854 = vmatprep.subr.mxu0 0.0
        %855 = vmatpush1.msra.mxu0 %v800
        %856 = vmatprep.subr.mxu0 0.0
        %857 = vmatpush1.msra.mxu0 %v801
        %858 = vmatprep.subr.mxu0 0.0
        %859 = vmatpush1.msra.mxu0 %v802
        %860 = vmatprep.subr.mxu0 0.0
        %861 = vmatpush1.msra.mxu0 %v803
        %862 = vmatprep.subr.mxu0 0.0
        %863 = vmatpush1.msra.mxu0 %v804
        %864 = vmatprep.subr.mxu0 0.0
        %865 = vmatpush1.msra.mxu0 0.0
        %866 = vmatprep.subr.mxu0 0.0
        %867 = vmatpush1.msra.mxu0 0.0
        %868 = vmatprep.subr.mxu0 0.0
        %869 = vmatpush1.msra.mxu0 0.0
        %870 = vmatprep.subr.mxu0 0.0
        %871 = vmatpush1.msra.mxu0 0.0
        %872 = vmatprep.subr.mxu0 0.0
        %873 = vmatpush1.msra.mxu0 0.0
        %874 = vmatprep.subr.mxu0 0.0
        %875 = vmatpush1.msra.mxu0 0.0
        %876 = vmatprep.subr.mxu0 0.0
        %877 = vmatpush1.msra.mxu0 0.0
        %878 = vmatprep.subr.mxu0 0.0
        %879 = vmatpush1.msra.mxu0 0.0
        %880 = vmatprep.subr.mxu0 0.0
        %881 = vmatpush1.msra.mxu0 0.0
        %882 = vmatprep.subr.mxu0 0.0
        %883 = vmatpush1.msra.mxu0 0.0
        %884 = vmatprep.subr.mxu0 0.0
        %885 = vmatpush1.msra.mxu0 0.0
        %886 = vmatprep.subr.mxu0 0.0
        %887 = vmatpush1.msra.mxu0 0.0
        %888 = vmatprep.subr.mxu0 0.0
        %889 = vmatpush1.msra.mxu0 0.0
        %890 = vmatprep.mubr.f32.mxu0 %v822
        %891 = vmatmul.mubr.f32.gmra.mrb[0].mxu0 %v812
        %v892 = vpop.f32.mrb[0].mxu0
        %v893 = vadd.f32 0.0, %v892
        %v894 = vpop.f32.mrb[0].mxu0
        %895 = vmatprep.mubr.f32.mxu0 %v824
        %896 = vmatmul.mubr.f32.gmra.mrb[0].mxu0 %v817
        %v897 = vpop.f32.mrb[0].mxu0
        %v898 = vadd.f32 0.0, %v897
        %v899 = vpop.f32.mrb[0].mxu0
        %900 = vdwg.mxu0
        %v901 = vadd.f32 %v779, %v893
        %v902 = vadd.f32 %v780, %v898
        %v903 = vld [vmem:[%s348] sm:$0xff]
        %v904 = vld [vmem:[%s348 + $0x8] sm:$0xff]
        %v905 = vld [vmem:[%s366] sm:$0xff]
        %v906 = vld [vmem:[%s366 + $0x8] sm:$0xff]
        %v907 = vld [vmem:[%s366 + $0x10] sm:$0xff]
        %v908 = vld [vmem:[%s366 + $0x18] sm:$0xff]
        %v909 = vld [vmem:[%s366 + $0x20] sm:$0xff]
        %v910 = vld [vmem:[%s366 + $0x28] sm:$0xff]
        %v911 = vld [vmem:[%s366 + $0x30] sm:$0xff]
        %v912 = vld [vmem:[%s366 + $0x38] sm:$0xff]
        %v913 = vld [vmem:[%s366 + $0x40] sm:$0xff]
        %v914 = vld [vmem:[%s366 + $0x48] sm:$0xff]
        %v915 = vld [vmem:[%s366 + $0x50] sm:$0xff]
        %v916 = vld [vmem:[%s366 + $0x58] sm:$0xff]
        %v917 = vld [vmem:[%s366 + $0x60] sm:$0xff]
        %v918 = vld [vmem:[%s366 + $0x68] sm:$0xff]
        %v919 = vld [vmem:[%s366 + $0x70] sm:$0xff]
        %v920 = vld [vmem:[%s366 + $0x78] sm:$0xff]
        %921 = vmatprep.subr.mxu0 0.0
        %922 = vmatpush1.msra.mxu0 %v905
        %923 = vmatprep.subr.mxu0 0.0
        %924 = vmatpush1.msra.mxu0 %v906
        %925 = vmatprep.subr.mxu0 0.0
        %926 = vmatpush1.msra.mxu0 %v907
        %927 = vmatprep.subr.mxu0 0.0
        %928 = vmatpush1.msra.mxu0 %v908
        %929 = vmatprep.subr.mxu0 0.0
        %930 = vmatpush1.msra.mxu0 %v909
        %931 = vmatprep.subr.mxu0 0.0
        %932 = vmatpush1.msra.mxu0 %v910
        %933 = vmatprep.subr.mxu0 0.0
        %934 = vmatpush1.msra.mxu0 %v911
        %935 = vmatprep.subr.mxu0 0.0
        %936 = vmatpush1.msra.mxu0 %v912
        %937 = vmatprep.subr.mxu0 0.0
        %938 = vmatpush1.msra.mxu0 %v913
        %939 = vmatprep.subr.mxu0 0.0
        %940 = vmatpush1.msra.mxu0 %v914
        %941 = vmatprep.subr.mxu0 0.0
        %942 = vmatpush1.msra.mxu0 %v915
        %943 = vmatprep.subr.mxu0 0.0
        %944 = vmatpush1.msra.mxu0 %v916
        %945 = vmatprep.subr.mxu0 0.0
        %946 = vmatpush1.msra.mxu0 %v917
        %947 = vmatprep.subr.mxu0 0.0
        %948 = vmatpush1.msra.mxu0 %v918
        %949 = vmatprep.subr.mxu0 0.0
        %950 = vmatpush1.msra.mxu0 %v919
        %951 = vmatprep.subr.mxu0 0.0
        %952 = vmatpush1.msra.mxu0 %v920
        %953 = vmatprep.subr.mxu0 0.0
        %954 = vmatpush1.msra.mxu0 0.0
        %955 = vmatprep.subr.mxu0 0.0
        %956 = vmatpush1.msra.mxu0 0.0
        %957 = vmatprep.subr.mxu0 0.0
        %958 = vmatpush1.msra.mxu0 0.0
        %959 = vmatprep.subr.mxu0 0.0
        %960 = vmatpush1.msra.mxu0 0.0
        %961 = vmatprep.subr.mxu0 0.0
        %962 = vmatpush1.msra.mxu0 0.0
        %963 = vmatprep.subr.mxu0 0.0
        %964 = vmatpush1.msra.mxu0 0.0
        %965 = vmatprep.subr.mxu0 0.0
        %966 = vmatpush1.msra.mxu0 0.0
        %967 = vmatprep.subr.mxu0 0.0
        %968 = vmatpush1.msra.mxu0 0.0
        %969 = vmatprep.subr.mxu0 0.0
        %970 = vmatpush1.msra.mxu0 0.0
        %971 = vmatprep.subr.mxu0 0.0
        %972 = vmatpush1.msra.mxu0 0.0
        %973 = vmatprep.subr.mxu0 0.0
        %974 = vmatpush1.msra.mxu0 0.0
        %975 = vmatprep.subr.mxu0 0.0
        %976 = vmatpush1.msra.mxu0 0.0
        %977 = vmatprep.subr.mxu0 0.0
        %978 = vmatpush1.msra.mxu0 0.0
        %979 = vmatprep.subr.mxu0 0.0
        %980 = vmatpush1.msra.mxu0 0.0
        %981 = vmatprep.subr.mxu0 0.0
        %982 = vmatpush1.msra.mxu0 0.0
        %983 = vmatprep.subr.mxu0 0.0
        %984 = vmatpush1.msra.mxu0 0.0
        %985 = vmatprep.mubr.f32.mxu0 0.0
        %986 = vmatmul.mubr.f32.gmra.mrb[0].mxu0 %v903
        %v987 = vpop.f32.mrb[0].mxu0
        %v988 = vadd.f32 0.0, %v987
        %v989 = vpop.f32.mrb[0].mxu0
        %990 = vmatprep.mubr.f32.mxu0 0.0
        %991 = vmatmul.mubr.f32.gmra.mrb[0].mxu0 %v904
        %v992 = vpop.f32.mrb[0].mxu0
        %v993 = vadd.f32 0.0, %v992
        %v994 = vpop.f32.mrb[0].mxu0
        %995 = vdwg.mxu0
        %v996 = vld [vmem:[%s375] sm:$0xff]
        %v997 = vld [vmem:[%s375 + $0x8] sm:$0xff]
        %vm998 = vcmask 130048
        %v1000 = vsel %vm998, %v996, 0
        %v1003 = vsel %vm998, %v997, 0
        %1005 = vmatprep.subr.mxu0 0.0
        %1006 = vmatpush1.msra.mxu0 %v988
        %1007 = vmatprep.subr.mxu0 0.0
        %1008 = vmatpush1.msra.mxu0 %v993
        %1009 = vmatprep.subr.mxu0 0.0
        %1010 = vmatpush1.msra.mxu0 0.0
        %1011 = vmatprep.subr.mxu0 0.0
        %1012 = vmatpush1.msra.mxu0 0.0
        %1013 = vmatprep.subr.mxu0 0.0
        %1014 = vmatpush1.msra.mxu0 0.0
        %1015 = vmatprep.subr.mxu0 0.0
        %1016 = vmatpush1.msra.mxu0 0.0
        %1017 = vmatprep.subr.mxu0 0.0
        %1018 = vmatpush1.msra.mxu0 0.0
        %1019 = vmatprep.subr.mxu0 0.0
        %1020 = vmatpush1.msra.mxu0 0.0
        %1021 = vmatprep.subr.mxu0 0.0
        %1022 = vmatpush1.msra.mxu0 0.0
        %1023 = vmatprep.subr.mxu0 0.0
        %1024 = vmatpush1.msra.mxu0 0.0
        %1025 = vmatprep.subr.mxu0 0.0
        %1026 = vmatpush1.msra.mxu0 0.0
        %1027 = vmatprep.subr.mxu0 0.0
        %1028 = vmatpush1.msra.mxu0 0.0
        %1029 = vmatprep.subr.mxu0 0.0
        %1030 = vmatpush1.msra.mxu0 0.0
        %1031 = vmatprep.subr.mxu0 0.0
        %1032 = vmatpush1.msra.mxu0 0.0
        %1033 = vmatprep.subr.mxu0 0.0
        %1034 = vmatpush1.msra.mxu0 0.0
        %1035 = vmatprep.subr.mxu0 0.0
        %1036 = vmatpush1.msra.mxu0 0.0
        %1037 = vmatprep.subr.mxu0 0.0
        %1038 = vmatpush1.msra.mxu0 0.0
        %1039 = vmatprep.subr.mxu0 0.0
        %1040 = vmatpush1.msra.mxu0 0.0
        %1041 = vmatprep.subr.mxu0 0.0
        %1042 = vmatpush1.msra.mxu0 0.0
        %1043 = vmatprep.subr.mxu0 0.0
        %1044 = vmatpush1.msra.mxu0 0.0
        %1045 = vmatprep.subr.mxu0 0.0
        %1046 = vmatpush1.msra.mxu0 0.0
        %1047 = vmatprep.subr.mxu0 0.0
        %1048 = vmatpush1.msra.mxu0 0.0
        %1049 = vmatprep.subr.mxu0 0.0
        %1050 = vmatpush1.msra.mxu0 0.0
        %1051 = vmatprep.subr.mxu0 0.0
        %1052 = vmatpush1.msra.mxu0 0.0
        %1053 = vmatprep.subr.mxu0 0.0
        %1054 = vmatpush1.msra.mxu0 0.0
        %1055 = vmatprep.subr.mxu0 0.0
        %1056 = vmatpush1.msra.mxu0 0.0
        %1057 = vmatprep.subr.mxu0 0.0
        %1058 = vmatpush1.msra.mxu0 0.0
        %1059 = vmatprep.subr.mxu0 0.0
        %1060 = vmatpush1.msra.mxu0 0.0
        %1061 = vmatprep.subr.mxu0 0.0
        %1062 = vmatpush1.msra.mxu0 0.0
        %1063 = vmatprep.subr.mxu0 0.0
        %1064 = vmatpush1.msra.mxu0 0.0
        %1065 = vmatprep.subr.mxu0 0.0
        %1066 = vmatpush1.msra.mxu0 0.0
        %1067 = vmatprep.subr.mxu0 0.0
        %1068 = vmatpush1.msra.mxu0 0.0
        %1069 = vmatprep.mubr.f32.mxu0 0.0
        %1070 = vmatmul.mubr.f32.gmra.mrb[0].mxu0 %v1000
        %v1071 = vpop.f32.mrb[0].mxu0
        %v1072 = vadd.f32 0.0, %v1071
        %v1073 = vpop.f32.mrb[0].mxu0
        %1074 = vmatprep.mubr.f32.mxu0 0.0
        %1075 = vmatmul.mubr.f32.gmra.mrb[0].mxu0 %v1003
        %v1076 = vpop.f32.mrb[0].mxu0
        %v1077 = vadd.f32 0.0, %v1076
        %v1078 = vpop.f32.mrb[0].mxu0
        %1079 = vdwg.mxu0
        %v1080 = vadd.f32 %v901, %v1072
        %v1081 = vadd.f32 %v902, %v1077
        %v1082 = vld [vmem:[#allocation10] sm:$0x1]
        %v1084 = vlaneseq
        %v1085 = vshrl.u32 %v1084, 7
        %v1086 = vsub.s32 0, %v1085
        %v1087 = vrot.slane %v1082, %v1086
        %v1089 = vadd.f32 %v1080, %v1087
        %v1090 = vadd.f32 %v1081, %v1087
        %1091 = vst [vmem:[%s427] sm:$0xff] %v1089
        %1092 = vst [vmem:[%s427 + $0x8] sm:$0xff] %v1090
        %s1093 = sand.u32 %s202, 1
        %s1094 = scalar_lea.sflag [#allocation4], %s1093
        %s1095 = sand.u32 %s202, 1
        %s1096 = smul.addr %s1095, 16
        %s1097 = scalar_lea.vmem [#allocation11], %s1096
        // Predicated region
        $region65: #{tpu_custom_call.1} parent=43 // pred_check
          %p1098 = pneg %p212
        $region66: #{tpu_custom_call.1} parent=43 // pred_check_branch
          %1100 = sbr.rel (%p1098) target = $region68
        $region67: #{tpu_custom_call.1} parent=43 // pred_region
          %s1102 = ssub.s32 256, 256
          %1103 = vsyncadd %s1094, %s1102
          %s1104 = smul.addr %s34, 2
          %s1105 = smul.addr %s33, 8
          %s1106 = sadd.s32 %s1104, %s1105
          %s1107 = smul.addr %s1106, 128
          %s1108 = scalar_lea.hbm %s6, %s1107
          %s1109 = sshll.u32 %s1097, 4
          %s1110 = int_to_ptr.vmem [resolvable:$true] %s1109
          %1115 = dma.vmem_to_hbm [thread:$0]  %s1110, 256, %s1108, %s1094, 128, 128, 8
        $region68: #{tpu_custom_call.1} parent=43 // pred_fallthru
          _
      $region44: #{tpu_custom_call.1} parent=5 // pred_fallthru
        _
      %p1116 = scmp.le.s32.totalorder 2, %s24
      // Predicated region
      $region69: #{tpu_custom_call.1} parent=5 // pred_check
        %p1117 = pneg %p1116
      $region70: #{tpu_custom_call.1} parent=5 // pred_check_branch
        %1119 = sbr.rel (%p1117) target = $region72
      $region71: #{tpu_custom_call.1} parent=5 // pred_region
        %s1120 = ssub.s32 %s24, 2
        // Predicated region
        $region73: #{tpu_custom_call.1} parent=71 // pred_check
          %p1121 = pneg %p218
        $region74: #{tpu_custom_call.1} parent=71 // pred_check_branch
          %1123 = sbr.rel (%p1121) target = $region76
        $region75: #{tpu_custom_call.1} parent=71 // pred_region
          %s1124 = sand.u32 %s203, 1
          %s1125 = scalar_lea.sflag [#allocation4], %s1124
          %s1126 = sand.u32 %s203, 1
          %s1127 = smul.addr %s1126, 16
          %s1128 = scalar_lea.vmem [#allocation11], %s1127
          %1129 = dma.done %s1125, 256
        $region76: #{tpu_custom_call.1} parent=71 // pred_fallthru
          _
      $region72: #{tpu_custom_call.1} parent=5 // pred_fallthru
        _
    $region6: #{tpu_custom_call.1} parent=1 // loop_footer
      %s28 = sadd.s32 1, %s24
    $region7: #{tpu_custom_call.1} parent=1 // loop_footer_branch
      %23 = sbr.rel target = $region3
    $region8: #{tpu_custom_call.1} parent=1 // loop_exit
      _
    %1130 = vsyncpa [#allocation3], 1
    %s1131 = scalar_lea.sflag [#allocation3], 1
    %1132 = vsyncpa %s1131, 1
    %1133 = vsyncpa [#allocation6], 1
    %s1134 = scalar_lea.sflag [#allocation6], 1
    %1135 = vsyncpa %s1134, 1
    %1136 = vsyncpa [#allocation9], 1
    %s1137 = scalar_lea.sflag [#allocation9], 1
    %1138 = vsyncpa %s1137, 1
    %1139 = vsyncpa [#allocation4], 1
    %s1140 = scalar_lea.sflag [#allocation4], 1
    %1141 = vsyncpa %s1140, 1

</llo_original>
